<compile_context>
chip_gen: v6e
topology: v6e:2x2x1
jax: 0.10.0
libtpu: 0.0.40
codegen_flags: <defaults>
</compile_context>

<pallas_src>
import functools

import jax
import jax.numpy as jnp
from jax.experimental import pallas as pl
from jax.experimental.pallas import tpu as pltpu


def _round_up(a, b):
    return (a + b - 1) // b * b


def _cosface_kernel(x_ref, w_ref, labels_ref, loss_ref,
                    xn_ref, m_ref, l_ref, t_ref,
                    *, s, m, num_classes, tile_c, mask_pad_classes):
    c_idx = pl.program_id(1)
    nc = pl.num_programs(1)

    eps_sq = jnp.float32(1e-24)     # clamp on sum-of-squares == torch eps=1e-12 on the norm
    big_neg = jnp.float32(-1e30)

    # ---- once per B tile: normalize x (rsqrt on EUP), cache as bf16 for the MXU,
    # ---- and reset the online-softmax accumulators.
    @pl.when(c_idx == 0)
    def _init():
        x = x_ref[...]                                               # (TILE_B, D) f32
        inv = jax.lax.rsqrt(jnp.maximum(jnp.sum(x * x, axis=1, keepdims=True), eps_sq))
        xn_ref[...] = (x * inv).astype(xn_ref.dtype)                 # bf16 cache
        m_ref[...] = jnp.full_like(m_ref, big_neg)
        l_ref[...] = jnp.zeros_like(l_ref)
        t_ref[...] = jnp.zeros_like(t_ref)

    # Cosine similarities on the MXU: bf16 x-cache @ bf16 pre-normalized weight
    # tile (column norms were applied once in the wrapper), f32 accumulation.
    cos = jnp.dot(xn_ref[...], w_ref[...], preferred_element_type=jnp.float32)

    labels = labels_ref[...]                                         # (TILE_B, 1) int32
    valid = labels != -1                                             # (TILE_B, 1) bool
    cls = c_idx * tile_c + jax.lax.broadcasted_iota(jnp.int32, cos.shape, 1)
    one_hot = jnp.logical_and(cls == labels, valid)                  # (TILE_B, TILE_C)

    # Margin on the target logit (only for valid rows), scale by s.
    logits = (cos - jnp.float32(m) * one_hot.astype(jnp.float32)) * jnp.float32(s)

    # ---- online (flash-style) softmax statistics across C tiles.
    def _accumulate(lg):
        m_prev = m_ref[...]
        m_new = jnp.maximum(m_prev, jnp.max(lg, axis=1, keepdims=True))
        alpha = jnp.exp(m_prev - m_new)
        l_ref[...] = alpha * l_ref[...] + jnp.sum(jnp.exp(lg - m_new), axis=1,
                                                  keepdims=True)
        m_ref[...] = m_new
        t_ref[...] = t_ref[...] + jnp.sum(jnp.where(one_hot, lg, 0.0), axis=1,
                                          keepdims=True)

    if mask_pad_classes:
        # Padded classes only exist in the last C tile: mask them to -inf there
        # and skip the (TILE_B, TILE_C) compare+select on every other tile.
        @pl.when(c_idx == nc - 1)
        def _last_tile():
            _accumulate(jnp.where(cls < num_classes, logits, big_neg))

        @pl.when(c_idx != nc - 1)
        def _inner_tile():
            _accumulate(logits)
    else:
        _accumulate(logits)

    # ---- finalize on the last C tile: per-row CE (masked for label == -1),
    # ---- written lane-dense (broadcast across 128 lanes -> unmasked vst).
    @pl.when(c_idx == nc - 1)
    def _finalize():
        lse = m_ref[...] + jnp.log(l_ref[...])                       # (TILE_B, 1)
        per_row = (lse - t_ref[...]) * valid.astype(jnp.float32)     # (TILE_B, 1)
        loss_ref[...] = jnp.broadcast_to(per_row, loss_ref.shape)


def cosface_loss(features, weight, labels, *, s=64.0, m=0.4,
                 tile_b=512, tile_c=2048, weight_buffers=2):
    """features: (B, D) f32, weight: (D, C) f32, labels: (B,) int -> scalar f32 loss."""
    B, D = features.shape
    Dw, C = weight.shape
    assert D == Dw

    # ---- tile sizing -------------------------------------------------------
    # Large TILE_B raises arithmetic intensity (weight stream passes = B/TILE_B)
    # and fills the 256-wide MXU M dim on v6e/v7x; but keep >= 2 B tiles when
    # halving still leaves >= 256 rows so both v7x TensorCores get work
    # (B is the only "parallel" grid axis).
    b8 = _round_up(B, 8)
    TILE_B = min(tile_b, b8)
    half_b = _round_up((b8 + 1) // 2, 8)
    if half_b >= 256:
        TILE_B = min(TILE_B, half_b)
    B_pad = _round_up(B, TILE_B)

    # Lane-dense C tiles; 2048 bf16 columns double-buffered is ~2 MiB at D=256,
    # trivially inside even v7x's 64 MiB VMEM while amortizing per-step overhead.
    TILE_C = min(tile_c, _round_up(C, 128))
    C_pad = _round_up(C, TILE_C)
    nb, nc = B_pad // TILE_B, C_pad // TILE_C

    # ---- host-side prep ----------------------------------------------------
    x = features.astype(jnp.float32)
    labels_i = labels.reshape(-1).astype(jnp.int32)
    if B_pad != B:
        x = jnp.pad(x, ((0, B_pad - B), (0, 0)))
        labels_i = jnp.pad(labels_i, (0, B_pad - B), constant_values=-1)
    labels2d = labels_i.reshape(B_pad, 1)

    # Pre-normalize weight columns ONCE in f32, stream as bf16 (halves the
    # dominant HBM traffic vs f32 and removes per-tile normalization).
    w32 = weight.astype(jnp.float32)
    w_inv = jax.lax.rsqrt(jnp.maximum(jnp.sum(w32 * w32, axis=0, keepdims=True),
                                      jnp.float32(1e-24)))
    w_bf16 = (w32 * w_inv).astype(jnp.bfloat16)
    if C_pad != C:
        w_bf16 = jnp.pad(w_bf16, ((0, 0), (0, C_pad - C)))

    kernel = functools.partial(_cosface_kernel, s=float(s), m=float(m),
                               num_classes=C, tile_c=TILE_C,
                               mask_pad_classes=(C_pad != C))

    # Features are VMEM-resident across the C axis (index_map (b, 0)), so their
    # bytes are counted once; weight (bf16) is streamed once per B tile.
    cost = pl.CostEstimate(
        flops=2 * B_pad * D * C_pad + 8 * B_pad * C_pad,
        transcendentals=B_pad * C_pad + 2 * B_pad * nc,
        bytes_accessed=(4 * B_pad * D            # features (one pass)
                        + 2 * D * C_pad * nb     # bf16 weight (nb passes)
                        + 4 * B_pad              # labels
                        + 4 * B_pad * 128),      # per-row loss output
    )

    # Optional deeper pipelining of the weight stream (worth sweeping on v7x).
    w_spec_kwargs = {}
    if weight_buffers is not None and weight_buffers != 2:
        w_spec_kwargs["pipeline_mode"] = pl.Buffered(weight_buffers)
    w_spec = pl.BlockSpec((D, TILE_C), lambda b, c: (0, c), **w_spec_kwargs)

    per_row = pl.pallas_call(
        kernel,
        out_shape=jax.ShapeDtypeStruct((B_pad, 128), jnp.float32),
        grid_spec=pltpu.PrefetchScalarGridSpec(
            num_scalar_prefetch=0,
            grid=(nb, nc),
            in_specs=[
                pl.BlockSpec((TILE_B, D), lambda b, c: (b, 0)),      # features (resident)
                w_spec,                                              # bf16 weight (streamed)
                pl.BlockSpec((TILE_B, 1), lambda b, c: (b, 0)),      # labels
            ],
            out_specs=pl.BlockSpec((TILE_B, 128), lambda b, c: (b, 0)),
            scratch_shapes=[
                pltpu.VMEM((TILE_B, D), jnp.bfloat16),               # cached normalized x
                pltpu.VMEM((TILE_B, 1), jnp.float32),                # running max
                pltpu.VMEM((TILE_B, 1), jnp.float32),                # running sum-exp
                pltpu.VMEM((TILE_B, 1), jnp.float32),                # target logit
            ],
        ),
        compiler_params=pltpu.CompilerParams(
            dimension_semantics=("parallel", "arbitrary"),
        ),
        cost_estimate=cost,
    )(x, w_bf16, labels2d)

    # Tiny final reduction (kept outside so the B grid axis stays parallel-safe).
    losses = per_row[:B, 0]
    n_valid = jnp.maximum(jnp.sum((labels_i[:B] != -1).astype(jnp.float32)), 1.0)
    return jnp.sum(losses) / n_valid


def _reference_loss(features, weight, labels, *, s=64.0, m=0.4, bf16_matmul=False):
    """Pure-JAX reference mirroring the PyTorch forward."""
    eps = 1e-12
    w = weight / jnp.maximum(jnp.linalg.norm(weight, axis=0, keepdims=True), eps)
    x = features / jnp.maximum(jnp.linalg.norm(features, axis=1, keepdims=True), eps)
    if bf16_matmul:
        cos = jnp.dot(x.astype(jnp.bfloat16), w.astype(jnp.bfloat16),
                      preferred_element_type=jnp.float32)
    else:
        cos = x @ w
    C = cos.shape[1]
    valid = labels != -1
    one_hot = (jax.nn.one_hot(jnp.where(valid, labels, 0), C)
               * valid[:, None].astype(jnp.float32))
    logits = (cos - m * one_hot) * s
    lse = jax.scipy.special.logsumexp(logits, axis=1)
    tgt = jnp.sum(logits * one_hot, axis=1)
    per_row = (lse - tgt) * valid.astype(jnp.float32)
    return jnp.sum(per_row) / jnp.maximum(jnp.sum(valid.astype(jnp.float32)), 1.0)


def _check(features, weight, labels, *, s, m, **kw):
    loss_fn = jax.jit(functools.partial(cosface_loss, s=s, m=m, **kw))
    loss = jax.block_until_ready(loss_fn(features, weight, labels))
    ref_bf16 = _reference_loss(features, weight, labels, s=s, m=m, bf16_matmul=True)
    ref_f32 = _reference_loss(features, weight, labels, s=s, m=m, bf16_matmul=False)
    assert jnp.allclose(loss, ref_bf16, rtol=1e-2, atol=1e-2), (loss, ref_bf16)
    assert jnp.allclose(loss, ref_f32, rtol=5e-2, atol=1e-1), (loss, ref_f32)
    return loss


if __name__ == "__main__":
    s_param, m_param = 64.0, 0.4
    key = jax.random.PRNGKey(0)

    # 1) Module defaults: feature_dim=256, num_classes=2; small batch.
    B, D, C = 8, 256, 2
    k_feat, k_w, k_lab, key = jax.random.split(key, 4)
    features = jax.random.normal(k_feat, (B, D), dtype=jnp.float32)
    weight = jax.random.normal(k_w, (D, C), dtype=jnp.float32)      # ~ torch.randn init
    labels = jax.random.randint(k_lab, (B,), 0, C, dtype=jnp.int32)
    _check(features, weight, labels, s=s_param, m=m_param)

    # 2) Multi-tile path (several B tiles, 2 C tiles with class padding,
    #    one ignored label) with small tiles to exercise the grid + mask logic.
    B2, C2 = 24, 200
    k_feat, k_w, k_lab = jax.random.split(key, 3)
    features2 = jax.random.normal(k_feat, (B2, D), dtype=jnp.float32)
    weight2 = jax.random.normal(k_w, (D, C2), dtype=jnp.float32)
    labels2 = jax.random.randint(k_lab, (B2,), 0, C2, dtype=jnp.int32)
    labels2 = labels2.at[3].set(-1)
    _check(features2, weight2, labels2, s=s_param, m=m_param, tile_b=8, tile_c=128)

    # TODO(synk): PyTorch's CrossEntropyLoss would error on label==-1 (ignore_index
    # defaults to -100); here rows with label==-1 are simply excluded from the mean.
    print("KERNEL_OK")
</pallas_src>

<mosaic_0001>
module attributes {stable_mosaic.version = 11 : i64} {
  func.func @_cosface_kernel(%arg0: i32, %arg1: i32, %arg2: memref<8x256xf32, #tpu.memory_space<vmem>>, %arg3: memref<256x128xbf16, #tpu.memory_space<vmem>>, %arg4: memref<8x1xi32, #tpu.memory_space<vmem>>, %arg5: memref<8x128xf32, #tpu.memory_space<vmem>>, %arg6: memref<8x256xbf16, #tpu.memory_space<vmem>>, %arg7: memref<8x1xf32, #tpu.memory_space<vmem>>, %arg8: memref<8x1xf32, #tpu.memory_space<vmem>>, %arg9: memref<8x1xf32, #tpu.memory_space<vmem>>) attributes {dimension_semantics = [#tpu.dimension_semantics<parallel>, #tpu.dimension_semantics<arbitrary>], iteration_bounds = array<i64: 1, 1>, scalar_prefetch = 0 : i64, scratch_operands = 4 : i64, tpu.core_type = #tpu.core_type<tc>, window_params = [{transform_indices = @transform_0, window_bounds = array<i64: 8, 256>}, {transform_indices = @transform_1, window_bounds = array<i64: 256, 128>}, {transform_indices = @transform_2, window_bounds = array<i64: 8, 1>}, {transform_indices = @transform_3, window_bounds = array<i64: 8, 128>}]} {
    %c0_i32 = arith.constant 0 : i32
    %0 = arith.cmpi eq, %arg1, %c0_i32 : i32
    %1 = arith.extui %0 : i1 to i32
    %cst = arith.constant 1.000000e-24 : f32
    %cst_0 = arith.constant -1.000000e+30 : f32
    %c0_i32_1 = arith.constant 0 : i32
    %2 = arith.cmpi ne, %1, %c0_i32_1 : i32
    scf.if %2 {
      %c0_17 = arith.constant 0 : index
      %c0_18 = arith.constant 0 : index
      %33 = vector.load %arg2[%c0_17, %c0_18] : memref<8x256xf32, #tpu.memory_space<vmem>>, vector<8x256xf32>
      %34 = arith.mulf %33, %33 : vector<8x256xf32>
      %cst_19 = arith.constant dense<0.000000e+00> : vector<8xf32>
      %35 = vector.multi_reduction <add>, %34, %cst_19 [1] : vector<8x256xf32> to vector<8xf32>
      %36 = vector.shape_cast %35 : vector<8xf32> to vector<8x1xf32>
      %37 = vector.broadcast %cst : f32 to vector<8x1xf32>
      %38 = arith.maximumf %36, %37 : vector<8x1xf32>
      %39 = math.rsqrt %38 : vector<8x1xf32>
      %40 = vector.broadcast %39 : vector<8x1xf32> to vector<8x256xf32>
      %41 = arith.mulf %33, %40 : vector<8x256xf32>
      %42 = arith.truncf %41 : vector<8x256xf32> to vector<8x256xbf16>
      %c0_20 = arith.constant 0 : index
      %c0_21 = arith.constant 0 : index
      %43 = vector.load %arg6[%c0_20, %c0_21] : memref<8x256xbf16, #tpu.memory_space<vmem>>, vector<8x256xbf16>
      tpu.vector_store %arg6[%c0_20, %c0_21], %42 {strides = array<i32>} : memref<8x256xbf16, #tpu.memory_space<vmem>>, vector<8x256xbf16>,
      %44 = vector.broadcast %cst_0 : f32 to vector<8x1xf32>
      %c0_22 = arith.constant 0 : index
      %c0_23 = arith.constant 0 : index
      %45 = vector.load %arg7[%c0_22, %c0_23] : memref<8x1xf32, #tpu.memory_space<vmem>>, vector<8x1xf32>
      tpu.vector_store %arg7[%c0_22, %c0_23], %44 {strides = array<i32>} : memref<8x1xf32, #tpu.memory_space<vmem>>, vector<8x1xf32>,
      %cst_24 = arith.constant 0.000000e+00 : f32
      %46 = vector.broadcast %cst_24 : f32 to vector<8x1xf32>
      %c0_25 = arith.constant 0 : index
      %c0_26 = arith.constant 0 : index
      %47 = vector.load %arg8[%c0_25, %c0_26] : memref<8x1xf32, #tpu.memory_space<vmem>>, vector<8x1xf32>
      tpu.vector_store %arg8[%c0_25, %c0_26], %46 {strides = array<i32>} : memref<8x1xf32, #tpu.memory_space<vmem>>, vector<8x1xf32>,
      %cst_27 = arith.constant 0.000000e+00 : f32
      %48 = vector.broadcast %cst_27 : f32 to vector<8x1xf32>
      %c0_28 = arith.constant 0 : index
      %c0_29 = arith.constant 0 : index
      %49 = vector.load %arg9[%c0_28, %c0_29] : memref<8x1xf32, #tpu.memory_space<vmem>>, vector<8x1xf32>
      tpu.vector_store %arg9[%c0_28, %c0_29], %48 {strides = array<i32>} : memref<8x1xf32, #tpu.memory_space<vmem>>, vector<8x1xf32>,
    } else {
    }
    %c0 = arith.constant 0 : index
    %c0_2 = arith.constant 0 : index
    %3 = vector.load %arg6[%c0, %c0_2] : memref<8x256xbf16, #tpu.memory_space<vmem>>, vector<8x256xbf16>
    %c0_3 = arith.constant 0 : index
    %c0_4 = arith.constant 0 : index
    %4 = vector.load %arg3[%c0_3, %c0_4] : memref<256x128xbf16, #tpu.memory_space<vmem>>, vector<256x128xbf16>
    %cst_5 = arith.constant dense<0.000000e+00> : vector<8x128xf32>
    %5 = tpu.matmul %3, %4, %cst_5 {dimension_numbers = #tpu.dot_dimension_numbers<[1], [0], [0], [1], [0, 0, 1, 1], [], []>} : vector<8x256xbf16>, vector<256x128xbf16>, vector<8x128xf32> -> vector<8x128xf32>
    %c0_6 = arith.constant 0 : index
    %c0_7 = arith.constant 0 : index
    %6 = vector.load %arg4[%c0_6, %c0_7] : memref<8x1xi32, #tpu.memory_space<vmem>>, vector<8x1xi32>
    %c-1_i32 = arith.constant -1 : i32
    %7 = vector.broadcast %c-1_i32 : i32 to vector<8x1xi32>
    %8 = arith.cmpi ne, %6, %7 : vector<8x1xi32>
    %c128_i32 = arith.constant 128 : i32
    %9 = arith.muli %arg1, %c128_i32 : i32
    %10 = tpu.iota {dimensions = array<i32: 1>} : vector<8x128xi32>
    %11 = vector.broadcast %9 : i32 to vector<8x128xi32>
    %12 = arith.addi %11, %10 : vector<8x128xi32>
    %13 = vector.broadcast %6 : vector<8x1xi32> to vector<8x128xi32>
    %14 = arith.cmpi eq, %12, %13 : vector<8x128xi32>
    %15 = vector.broadcast %8 : vector<8x1xi1> to vector<8x128xi1>
    %16 = arith.andi %14, %15 : vector<8x128xi1>
    %17 = arith.extui %16 : vector<8x128xi1> to vector<8x128xi32>
    %18 = arith.sitofp %17 : vector<8x128xi32> to vector<8x128xf32>
    %cst_8 = arith.constant 4.000000e-01 : f32
    %19 = vector.broadcast %cst_8 : f32 to vector<8x128xf32>
    %20 = arith.mulf %19, %18 : vector<8x128xf32>
    %21 = arith.subf %5, %20 : vector<8x128xf32>
    %cst_9 = arith.constant 6.400000e+01 : f32
    %22 = vector.broadcast %cst_9 : f32 to vector<8x128xf32>
    %23 = arith.mulf %21, %22 : vector<8x128xf32>
    %c0_i32_10 = arith.constant 0 : i32
    %24 = arith.cmpi eq, %arg1, %c0_i32_10 : i32
    %25 = arith.extui %24 : i1 to i32
    %cst_11 = arith.constant -1.000000e+30 : f32
    %c0_i32_12 = arith.constant 0 : i32
    %26 = arith.cmpi ne, %25, %c0_i32_12 : i32
    scf.if %26 {
      %c2_i32 = arith.constant 2 : i32
      %33 = vector.broadcast %c2_i32 : i32 to vector<8x128xi32>
      %34 = arith.cmpi slt, %12, %33 : vector<8x128xi32>
      %35 = vector.broadcast %cst_11 : f32 to vector<8x128xf32>
      %36 = arith.select %34, %23, %35 : vector<8x128xi1>, vector<8x128xf32>
      %c0_17 = arith.constant 0 : index
      %c0_18 = arith.constant 0 : index
      %37 = vector.load %arg7[%c0_17, %c0_18] : memref<8x1xf32, #tpu.memory_space<vmem>>, vector<8x1xf32>
      %cst_19 = arith.constant dense<0xFF800000> : vector<8xf32>
      %38 = vector.multi_reduction <maximumf>, %36, %cst_19 [1] : vector<8x128xf32> to vector<8xf32>
      %39 = vector.shape_cast %38 : vector<8xf32> to vector<8x1xf32>
      %40 = arith.maximumf %37, %39 : vector<8x1xf32>
      %41 = arith.subf %37, %40 : vector<8x1xf32>
      %42 = math.exp %41 : vector<8x1xf32>
      %c0_20 = arith.constant 0 : index
      %c0_21 = arith.constant 0 : index
      %43 = vector.load %arg8[%c0_20, %c0_21] : memref<8x1xf32, #tpu.memory_space<vmem>>, vector<8x1xf32>
      %44 = arith.mulf %42, %43 : vector<8x1xf32>
      %45 = vector.broadcast %40 : vector<8x1xf32> to vector<8x128xf32>
      %46 = arith.subf %36, %45 : vector<8x128xf32>
      %47 = math.exp %46 : vector<8x128xf32>
      %cst_22 = arith.constant dense<0.000000e+00> : vector<8xf32>
      %48 = vector.multi_reduction <add>, %47, %cst_22 [1] : vector<8x128xf32> to vector<8xf32>
      %49 = vector.shape_cast %48 : vector<8xf32> to vector<8x1xf32>
      %50 = arith.addf %44, %49 : vector<8x1xf32>
      %c0_23 = arith.constant 0 : index
      %c0_24 = arith.constant 0 : index
      %51 = vector.load %arg8[%c0_23, %c0_24] : memref<8x1xf32, #tpu.memory_space<vmem>>, vector<8x1xf32>
      tpu.vector_store %arg8[%c0_23, %c0_24], %50 {strides = array<i32>} : memref<8x1xf32, #tpu.memory_space<vmem>>, vector<8x1xf32>,
      %c0_25 = arith.constant 0 : index
      %c0_26 = arith.constant 0 : index
      %52 = vector.load %arg7[%c0_25, %c0_26] : memref<8x1xf32, #tpu.memory_space<vmem>>, vector<8x1xf32>
      tpu.vector_store %arg7[%c0_25, %c0_26], %40 {strides = array<i32>} : memref<8x1xf32, #tpu.memory_space<vmem>>, vector<8x1xf32>,
      %c0_27 = arith.constant 0 : index
      %c0_28 = arith.constant 0 : index
      %53 = vector.load %arg9[%c0_27, %c0_28] : memref<8x1xf32, #tpu.memory_space<vmem>>, vector<8x1xf32>
      %cst_29 = arith.constant 0.000000e+00 : f32
      %54 = vector.broadcast %cst_29 : f32 to vector<8x128xf32>
      %55 = arith.select %16, %36, %54 : vector<8x128xi1>, vector<8x128xf32>
      %cst_30 = arith.constant dense<0.000000e+00> : vector<8xf32>
      %56 = vector.multi_reduction <add>, %55, %cst_30 [1] : vector<8x128xf32> to vector<8xf32>
      %57 = vector.shape_cast %56 : vector<8xf32> to vector<8x1xf32>
      %58 = arith.addf %53, %57 : vector<8x1xf32>
      %c0_31 = arith.constant 0 : index
      %c0_32 = arith.constant 0 : index
      %59 = vector.load %arg9[%c0_31, %c0_32] : memref<8x1xf32, #tpu.memory_space<vmem>>, vector<8x1xf32>
      tpu.vector_store %arg9[%c0_31, %c0_32], %58 {strides = array<i32>} : memref<8x1xf32, #tpu.memory_space<vmem>>, vector<8x1xf32>,
    } else {
    }
    %c0_i32_13 = arith.constant 0 : i32
    %27 = arith.cmpi ne, %arg1, %c0_i32_13 : i32
    %28 = arith.extui %27 : i1 to i32
    %c0_i32_14 = arith.constant 0 : i32
    %29 = arith.cmpi ne, %28, %c0_i32_14 : i32
    scf.if %29 {
      %c0_17 = arith.constant 0 : index
      %c0_18 = arith.constant 0 : index
      %33 = vector.load %arg7[%c0_17, %c0_18] : memref<8x1xf32, #tpu.memory_space<vmem>>, vector<8x1xf32>
      %cst_19 = arith.constant dense<0xFF800000> : vector<8xf32>
      %34 = vector.multi_reduction <maximumf>, %23, %cst_19 [1] : vector<8x128xf32> to vector<8xf32>
      %35 = vector.shape_cast %34 : vector<8xf32> to vector<8x1xf32>
      %36 = arith.maximumf %33, %35 : vector<8x1xf32>
      %37 = arith.subf %33, %36 : vector<8x1xf32>
      %38 = math.exp %37 : vector<8x1xf32>
      %c0_20 = arith.constant 0 : index
      %c0_21 = arith.constant 0 : index
      %39 = vector.load %arg8[%c0_20, %c0_21] : memref<8x1xf32, #tpu.memory_space<vmem>>, vector<8x1xf32>
      %40 = arith.mulf %38, %39 : vector<8x1xf32>
      %41 = vector.broadcast %36 : vector<8x1xf32> to vector<8x128xf32>
      %42 = arith.subf %23, %41 : vector<8x128xf32>
      %43 = math.exp %42 : vector<8x128xf32>
      %cst_22 = arith.constant dense<0.000000e+00> : vector<8xf32>
      %44 = vector.multi_reduction <add>, %43, %cst_22 [1] : vector<8x128xf32> to vector<8xf32>
      %45 = vector.shape_cast %44 : vector<8xf32> to vector<8x1xf32>
      %46 = arith.addf %40, %45 : vector<8x1xf32>
      %c0_23 = arith.constant 0 : index
      %c0_24 = arith.constant 0 : index
      %47 = vector.load %arg8[%c0_23, %c0_24] : memref<8x1xf32, #tpu.memory_space<vmem>>, vector<8x1xf32>
      tpu.vector_store %arg8[%c0_23, %c0_24], %46 {strides = array<i32>} : memref<8x1xf32, #tpu.memory_space<vmem>>, vector<8x1xf32>,
      %c0_25 = arith.constant 0 : index
      %c0_26 = arith.constant 0 : index
      %48 = vector.load %arg7[%c0_25, %c0_26] : memref<8x1xf32, #tpu.memory_space<vmem>>, vector<8x1xf32>
      tpu.vector_store %arg7[%c0_25, %c0_26], %36 {strides = array<i32>} : memref<8x1xf32, #tpu.memory_space<vmem>>, vector<8x1xf32>,
      %c0_27 = arith.constant 0 : index
      %c0_28 = arith.constant 0 : index
      %49 = vector.load %arg9[%c0_27, %c0_28] : memref<8x1xf32, #tpu.memory_space<vmem>>, vector<8x1xf32>
      %cst_29 = arith.constant 0.000000e+00 : f32
      %50 = vector.broadcast %cst_29 : f32 to vector<8x128xf32>
      %51 = arith.select %16, %23, %50 : vector<8x128xi1>, vector<8x128xf32>
      %cst_30 = arith.constant dense<0.000000e+00> : vector<8xf32>
      %52 = vector.multi_reduction <add>, %51, %cst_30 [1] : vector<8x128xf32> to vector<8xf32>
      %53 = vector.shape_cast %52 : vector<8xf32> to vector<8x1xf32>
      %54 = arith.addf %49, %53 : vector<8x1xf32>
      %c0_31 = arith.constant 0 : index
      %c0_32 = arith.constant 0 : index
      %55 = vector.load %arg9[%c0_31, %c0_32] : memref<8x1xf32, #tpu.memory_space<vmem>>, vector<8x1xf32>
      tpu.vector_store %arg9[%c0_31, %c0_32], %54 {strides = array<i32>} : memref<8x1xf32, #tpu.memory_space<vmem>>, vector<8x1xf32>,
    } else {
    }
    %c0_i32_15 = arith.constant 0 : i32
    %30 = arith.cmpi eq, %arg1, %c0_i32_15 : i32
    %31 = arith.extui %30 : i1 to i32
    %c0_i32_16 = arith.constant 0 : i32
    %32 = arith.cmpi ne, %31, %c0_i32_16 : i32
    scf.if %32 {
      %c0_17 = arith.constant 0 : index
      %c0_18 = arith.constant 0 : index
      %33 = vector.load %arg7[%c0_17, %c0_18] : memref<8x1xf32, #tpu.memory_space<vmem>>, vector<8x1xf32>
      %c0_19 = arith.constant 0 : index
      %c0_20 = arith.constant 0 : index
      %34 = vector.load %arg8[%c0_19, %c0_20] : memref<8x1xf32, #tpu.memory_space<vmem>>, vector<8x1xf32>
      %35 = math.log %34 : vector<8x1xf32>
      %36 = arith.addf %33, %35 : vector<8x1xf32>
      %c0_21 = arith.constant 0 : index
      %c0_22 = arith.constant 0 : index
      %37 = vector.load %arg9[%c0_21, %c0_22] : memref<8x1xf32, #tpu.memory_space<vmem>>, vector<8x1xf32>
      %38 = arith.subf %36, %37 : vector<8x1xf32>
      %39 = arith.extui %8 : vector<8x1xi1> to vector<8x1xi32>
      %40 = arith.sitofp %39 : vector<8x1xi32> to vector<8x1xf32>
      %41 = arith.mulf %38, %40 : vector<8x1xf32>
      %42 = vector.shape_cast %41 : vector<8x1xf32> to vector<8x1xf32>
      %43 = vector.broadcast %42 : vector<8x1xf32> to vector<8x128xf32>
      %c0_23 = arith.constant 0 : index
      %c0_24 = arith.constant 0 : index
      %44 = vector.load %arg5[%c0_23, %c0_24] : memref<8x128xf32, #tpu.memory_space<vmem>>, vector<8x128xf32>
      tpu.vector_store %arg5[%c0_23, %c0_24], %43 {strides = array<i32>} : memref<8x128xf32, #tpu.memory_space<vmem>>, vector<8x128xf32>,
    } else {
    }
    return
  }
  func.func @transform_0(%arg0: i32, %arg1: i32) -> (i32, i32) {
    %c0_i32 = arith.constant 0 : i32
    %c0_i32_0 = arith.constant 0 : i32
    return %arg0, %c0_i32 : i32, i32
  }
  func.func @transform_1(%arg0: i32, %arg1: i32) -> (i32, i32) {
    %c0_i32 = arith.constant 0 : i32
    %c0_i32_0 = arith.constant 0 : i32
    return %c0_i32, %arg1 : i32, i32
  }
  func.func @transform_2(%arg0: i32, %arg1: i32) -> (i32, i32) {
    %c0_i32 = arith.constant 0 : i32
    %c0_i32_0 = arith.constant 0 : i32
    return %arg0, %c0_i32 : i32, i32
  }
  func.func @transform_3(%arg0: i32, %arg1: i32) -> (i32, i32) {
    %c0_i32 = arith.constant 0 : i32
    %c0_i32_0 = arith.constant 0 : i32
    return %arg0, %c0_i32 : i32, i32
  }
}

</mosaic_0001>

<llo_original>
// kernel: cosface_loss.1
$region0: #{cosface_loss.1}
  #allocation0 [shape = 'u32[]', space=smem, size = 0x4, offset = 0x4, fixed_abs, tag = 'smem constant byte address 0x4 - core index']
  #allocation1 [shape = 'u32[144,128]{1,0:T(1,128)}', space=vmem, size = 0x12000, scoped, tag = 'internal scratch']
  #allocation2 [shape = 'bf16[8,256]{1,0:T(8,128)(2,1)}', space=vmem, size = 0x1000, scoped, tag = 'scratch operand']
  #allocation3 [shape = 'f32[8,1]{1,0:T(8,128)}', space=vmem, size = 0x1000, scoped, tag = 'scratch operand']
  #allocation4 [shape = 'f32[8,1]{1,0:T(8,128)}', space=vmem, size = 0x1000, scoped, tag = 'scratch operand']
  #allocation5 [shape = 'f32[8,1]{1,0:T(8,128)}', space=vmem, size = 0x1000, scoped, tag = 'scratch operand']
  %s0 = inlined_call_operand.vmem [shape: f32[8,256], index: 0, kind: input, shape index: {}]
  %s1 = inlined_call_operand.vmem [shape: bf16[256,128], index: 1, kind: input, shape index: {}]
  %s2 = inlined_call_operand.vmem [shape: s32[8,1], index: 2, kind: input, shape index: {}]
  %s3 = inlined_call_operand.vmem [shape: f32[8,128], index: 3, kind: output, shape index: {}]
  %s4 = sld [smem:[#allocation0]]
  $region38: #{cosface_loss.1} parent=0
    _
  %s6 = ssub.s32 1, %s4
  %s7 = scalar_select 0, %s6, %s4
  // Predicated region
  $region2: #{cosface_loss.1} parent=0 // pred_check
    _
  $region3: #{cosface_loss.1} parent=0 // pred_check_branch
    %9 = sbr.rel (0) target = $region5
  $region4: #{cosface_loss.1} parent=0 // pred_region
    _
  $region5: #{cosface_loss.1} parent=0 // pred_fallthru
    _
  // Predicated region
  $region6: #{cosface_loss.1} parent=0 // pred_check
    _
  $region7: #{cosface_loss.1} parent=0 // pred_check_branch
    %11 = sbr.rel (0) target = $region9
  $region8: #{cosface_loss.1} parent=0 // pred_region
    _
  $region9: #{cosface_loss.1} parent=0 // pred_fallthru
    _
  // Predicated region
  $region10: #{cosface_loss.1} parent=0 // pred_check
    _
  $region11: #{cosface_loss.1} parent=0 // pred_check_branch
    %13 = sbr.rel (0) target = $region13
  $region12: #{cosface_loss.1} parent=0 // pred_region
    _
  $region13: #{cosface_loss.1} parent=0 // pred_fallthru
    _
  %p15 = scmp.eq.s32.totalorder 0, 0
  // Predicated region
  $region14: #{cosface_loss.1} parent=0 // pred_check
    %p16 = pneg %p15
  $region15: #{cosface_loss.1} parent=0 // pred_check_branch
    %18 = sbr.rel (%p16) target = $region17
  $region16: #{cosface_loss.1} parent=0 // pred_region
    %v19 = vld [vmem:[%s0] sm:$0xff]
    %v20 = vld [vmem:[%s0 + $0x8] sm:$0xff]
    %v21 = vmul.f32 %v19, %v19
    %v22 = vmul.f32 %v20, %v20
    %v23 = vadd.f32 %v21, %v22
    %24 = vadd.xlane.f32.xlu0 %v23
    %v25 = vpop.xlane.xlu0 %24
    %v26 = vmax.f32 %v25, 1e-24
    %v27 = vrsqrt.pop %v26
    %v28 = vmul.f32 %v19, %v27
    %v29 = vmul.f32 %v20, %v27
    %v30 = vpack.c.bf16 %v28, %v28
    %v31 = vpack.c.bf16 %v29, %v29
    %v34 = vunpack.c.l.b16 %v30
    %v35 = vunpack.c.l.b16 %v31
    %v36 = vpack.c.b16 %v35, %v34
    %38 = vst [vmem:[#allocation2] sm:$0xff] %v36
    %vm39 = vcmask 7168
    %40 = vst.msk [vmem:[#allocation3] sm:$0xff] %vm39, -1e+30
    %41 = vst.msk [vmem:[#allocation4] sm:$0xff] %vm39, 0.0
    %42 = vst.msk [vmem:[#allocation5] sm:$0xff] %vm39, 0.0
  $region17: #{cosface_loss.1} parent=0 // pred_fallthru
    _
  %v43 = vld [vmem:[#allocation2] sm:$0xff]
  %v44 = vld [vmem:[%s1] sm:$0xf]
  %v45 = vld [vmem:[%s1 + $0x4] sm:$0xf]
  %v46 = vld [vmem:[%s1 + $0x8] sm:$0xf]
  %v47 = vld [vmem:[%s1 + $0xc] sm:$0xf]
  %v48 = vld [vmem:[%s1 + $0x10] sm:$0xf]
  %v49 = vld [vmem:[%s1 + $0x14] sm:$0xf]
  %v50 = vld [vmem:[%s1 + $0x18] sm:$0xf]
  %v51 = vld [vmem:[%s1 + $0x1c] sm:$0xf]
  %v52 = vld [vmem:[%s1 + $0x20] sm:$0xf]
  %v53 = vld [vmem:[%s1 + $0x24] sm:$0xf]
  %v54 = vld [vmem:[%s1 + $0x28] sm:$0xf]
  %v55 = vld [vmem:[%s1 + $0x2c] sm:$0xf]
  %v56 = vld [vmem:[%s1 + $0x30] sm:$0xf]
  %v57 = vld [vmem:[%s1 + $0x34] sm:$0xf]
  %v58 = vld [vmem:[%s1 + $0x38] sm:$0xf]
  %v59 = vld [vmem:[%s1 + $0x3c] sm:$0xf]
  %v60 = vld [vmem:[%s1 + $0x40] sm:$0xf]
  %v61 = vld [vmem:[%s1 + $0x44] sm:$0xf]
  %v62 = vld [vmem:[%s1 + $0x48] sm:$0xf]
  %v63 = vld [vmem:[%s1 + $0x4c] sm:$0xf]
  %v64 = vld [vmem:[%s1 + $0x50] sm:$0xf]
  %v65 = vld [vmem:[%s1 + $0x54] sm:$0xf]
  %v66 = vld [vmem:[%s1 + $0x58] sm:$0xf]
  %v67 = vld [vmem:[%s1 + $0x5c] sm:$0xf]
  %v68 = vld [vmem:[%s1 + $0x60] sm:$0xf]
  %v69 = vld [vmem:[%s1 + $0x64] sm:$0xf]
  %v70 = vld [vmem:[%s1 + $0x68] sm:$0xf]
  %v71 = vld [vmem:[%s1 + $0x6c] sm:$0xf]
  %v72 = vld [vmem:[%s1 + $0x70] sm:$0xf]
  %v73 = vld [vmem:[%s1 + $0x74] sm:$0xf]
  %v74 = vld [vmem:[%s1 + $0x78] sm:$0xf]
  %v75 = vld [vmem:[%s1 + $0x7c] sm:$0xf]
  %v77 = vunpack.c.l.b16 %v43
  %v78 = vunpack.c.h.b16 %v43
  %v79 = vpack.c.b16 %v77, %v77
  %v80 = vpack.c.b16 %v78, %v78
  %v115 = vunpack.c.l.b16 %v44
  %v116 = vunpack.c.l.b16 %v45
  %v117 = vunpack.c.l.b16 %v46
  %v118 = vunpack.c.l.b16 %v47
  %v119 = vunpack.c.l.b16 %v48
  %v120 = vunpack.c.l.b16 %v49
  %v121 = vunpack.c.l.b16 %v50
  %v122 = vunpack.c.l.b16 %v51
  %v123 = vunpack.c.l.b16 %v52
  %v124 = vunpack.c.l.b16 %v53
  %v125 = vunpack.c.l.b16 %v54
  %v126 = vunpack.c.l.b16 %v55
  %v127 = vunpack.c.l.b16 %v56
  %v128 = vunpack.c.l.b16 %v57
  %v129 = vunpack.c.l.b16 %v58
  %v130 = vunpack.c.l.b16 %v59
  %v131 = vunpack.c.l.b16 %v60
  %v132 = vunpack.c.l.b16 %v61
  %v133 = vunpack.c.l.b16 %v62
  %v134 = vunpack.c.l.b16 %v63
  %v135 = vunpack.c.l.b16 %v64
  %v136 = vunpack.c.l.b16 %v65
  %v137 = vunpack.c.l.b16 %v66
  %v138 = vunpack.c.l.b16 %v67
  %v139 = vunpack.c.l.b16 %v68
  %v140 = vunpack.c.l.b16 %v69
  %v141 = vunpack.c.l.b16 %v70
  %v142 = vunpack.c.l.b16 %v71
  %v143 = vunpack.c.l.b16 %v72
  %v144 = vunpack.c.l.b16 %v73
  %v145 = vunpack.c.l.b16 %v74
  %v146 = vunpack.c.l.b16 %v75
  %v147 = vpack.c.b16 %v116, %v115
  %v148 = vpack.c.b16 %v118, %v117
  %v149 = vpack.c.b16 %v120, %v119
  %v150 = vpack.c.b16 %v122, %v121
  %v151 = vpack.c.b16 %v124, %v123
  %v152 = vpack.c.b16 %v126, %v125
  %v153 = vpack.c.b16 %v128, %v127
  %v154 = vpack.c.b16 %v130, %v129
  %v155 = vpack.c.b16 %v132, %v131
  %v156 = vpack.c.b16 %v134, %v133
  %v157 = vpack.c.b16 %v136, %v135
  %v158 = vpack.c.b16 %v138, %v137
  %v159 = vpack.c.b16 %v140, %v139
  %v160 = vpack.c.b16 %v142, %v141
  %v161 = vpack.c.b16 %v144, %v143
  %v162 = vpack.c.b16 %v146, %v145
  %179 = vmatprep.subr.bf16.mxu0 0
  %180 = vmatpush1.bf16.msra.mxu0 %v154
  %181 = vmatprep.subr.bf16.mxu0 0
  %182 = vmatpush1.bf16.msra.mxu0 %v153
  %183 = vmatprep.subr.bf16.mxu0 0
  %184 = vmatpush1.bf16.msra.mxu0 %v152
  %185 = vmatprep.subr.bf16.mxu0 0
  %186 = vmatpush1.bf16.msra.mxu0 %v151
  %187 = vmatprep.subr.bf16.mxu0 0
  %188 = vmatpush1.bf16.msra.mxu0 %v150
  %189 = vmatprep.subr.bf16.mxu0 0
  %190 = vmatpush1.bf16.msra.mxu0 %v149
  %191 = vmatprep.subr.bf16.mxu0 0
  %192 = vmatpush1.bf16.msra.mxu0 %v148
  %193 = vmatprep.subr.bf16.mxu0 0
  %194 = vmatpush1.bf16.msra.mxu0 %v147
  %195 = vmatprep.subr.bf16.mxu0 0
  %196 = vmatpush2.bf16.msra.mxu0 %v162
  %197 = vmatprep.subr.bf16.mxu0 0
  %198 = vmatpush2.bf16.msra.mxu0 %v161
  %199 = vmatprep.subr.bf16.mxu0 0
  %200 = vmatpush2.bf16.msra.mxu0 %v160
  %201 = vmatprep.subr.bf16.mxu0 0
  %202 = vmatpush2.bf16.msra.mxu0 %v159
  %203 = vmatprep.subr.bf16.mxu0 0
  %204 = vmatpush2.bf16.msra.mxu0 %v158
  %205 = vmatprep.subr.bf16.mxu0 0
  %206 = vmatpush2.bf16.msra.mxu0 %v157
  %207 = vmatprep.subr.bf16.mxu0 0
  %208 = vmatpush2.bf16.msra.mxu0 %v156
  %209 = vmatprep.subr.bf16.mxu0 0
  %210 = vmatpush2.bf16.msra.mxu0 %v155
  %211 = vmatprep.mubr.bf16.mxu0 %v80
  %212 = vmatmul.mubr.bf16.gmra.mxu0 %v79
  %v213 = vpop.f32.mrf.mxu0
  %v214 = vadd.f32 0.0, %v213
  %v215 = vpop.f32.mrf.mxu0
  %v216 = vpop.f32.mrf.mxu0
  %v217 = vpop.f32.mrf.mxu0
  %218 = vdwg.mxu0
  %v219 = vld [vmem:[%s2] sm:$0xff]
  %vm220 = vcmp.ne.s32.totalorder %v219, 4294967295
  %s221 = smul.u32 0, 128
  %v222 = vlaneseq
  %v223 = vand.u32 %v222, 127
  %v224 = vstv %s221
  %v225 = vadd.s32 %v224, %v223
  %226 = vset.pattern.permute.xlu0 0
  %227 = vperm.xlu0 %226, %v219
  %v228 = vpop.permute.xlu0 %227
  %vm229 = vcmp.eq.s32.totalorder %v225, %v228
  %v230 = vsel %vm220, 1, 0
  %231 = vset.pattern.permute.xlu0 0
  %232 = vperm.xlu0 %231, %v230
  %v233 = vpop.permute.xlu0 %232
  %vm234 = vcmp.eq.s32.totalorder %v233, 1
  %vm235 = vmand %vm229, %vm234
  %v236 = vsel %vm235, 1, 0
  %v237 = vcvt.s32.f32 %v236
  %v238 = vmul.f32 %v237, 0.4
  %v239 = vsub.f32 %v214, %v238
  %v240 = vmul.f32 %v239, 64.0
  // Predicated region
  $region18: #{cosface_loss.1} parent=0 // pred_check
    %p241 = pneg %p15
  $region19: #{cosface_loss.1} parent=0 // pred_check_branch
    %243 = sbr.rel (%p241) target = $region21
  $region20: #{cosface_loss.1} parent=0 // pred_region
    %vm244 = vcmp.lt.s32.totalorder %v225, 2
    %v245 = vsel %vm244, %v240, -1e+30
    %v246 = vld [vmem:[#allocation3] sm:$0xff]
    %247 = vmax.xlane.f32.xlu0 %v245
    %v248 = vpop.xlane.xlu0 %247
    %v249 = vmax.f32 %v246, %v248
    %v250 = vsub.f32 %v246, %v249
    %v251 = vmul.f32 %v250, 1.442695
    %v252 = vpow.pop %v251
    %v253 = vld [vmem:[#allocation4] sm:$0xff]
    %v254 = vmul.f32 %v252, %v253
    %256 = vset.pattern.permute.xlu0 0
    %257 = vperm.xlu0 %256, %v249
    %v258 = vpop.permute.xlu0 %257
    %v260 = vsub.f32 %v245, %v258
    %v261 = vmul.f32 %v260, 1.442695
    %v262 = vpow.pop %v261
    %263 = vadd.xlane.f32.xlu0 %v262
    %v264 = vpop.xlane.xlu0 %263
    %v265 = vadd.f32 %v254, %v264
    %vm266 = vcmask 7168
    %267 = vst.msk [vmem:[#allocation4] sm:$0xff] %vm266, %v265
    %268 = vst.msk [vmem:[#allocation3] sm:$0xff] %vm266, %v249
    %v269 = vld [vmem:[#allocation5] sm:$0xff]
    %v270 = vsel %vm235, %v245, 0.0
    %271 = vadd.xlane.f32.xlu0 %v270
    %v272 = vpop.xlane.xlu0 %271
    %v273 = vadd.f32 %v269, %v272
    %274 = vst.msk [vmem:[#allocation5] sm:$0xff] %vm266, %v273
  $region21: #{cosface_loss.1} parent=0 // pred_fallthru
    _
  %p275 = scmp.ne.s32.totalorder 0, 0
  // Predicated region
  $region22: #{cosface_loss.1} parent=0 // pred_check
    %p276 = pneg %p275
  $region23: #{cosface_loss.1} parent=0 // pred_check_branch
    %278 = sbr.rel (%p276) target = $region25
  $region24: #{cosface_loss.1} parent=0 // pred_region
    %v279 = vld [vmem:[#allocation3] sm:$0xff]
    %280 = vmax.xlane.f32.xlu0 %v240
    %v281 = vpop.xlane.xlu0 %280
    %v282 = vmax.f32 %v279, %v281
    %v283 = vsub.f32 %v279, %v282
    %v284 = vmul.f32 %v283, 1.442695
    %v285 = vpow.pop %v284
    %v286 = vld [vmem:[#allocation4] sm:$0xff]
    %v287 = vmul.f32 %v285, %v286
    %289 = vset.pattern.permute.xlu0 0
    %290 = vperm.xlu0 %289, %v282
    %v291 = vpop.permute.xlu0 %290
    %v293 = vsub.f32 %v240, %v291
    %v294 = vmul.f32 %v293, 1.442695
    %v295 = vpow.pop %v294
    %296 = vadd.xlane.f32.xlu0 %v295
    %v297 = vpop.xlane.xlu0 %296
    %v298 = vadd.f32 %v287, %v297
    %vm299 = vcmask 7168
    %300 = vst.msk [vmem:[#allocation4] sm:$0xff] %vm299, %v298
    %301 = vst.msk [vmem:[#allocation3] sm:$0xff] %vm299, %v282
    %v302 = vld [vmem:[#allocation5] sm:$0xff]
    %v303 = vsel %vm235, %v240, 0.0
    %304 = vadd.xlane.f32.xlu0 %v303
    %v305 = vpop.xlane.xlu0 %304
    %v306 = vadd.f32 %v302, %v305
    %307 = vst.msk [vmem:[#allocation5] sm:$0xff] %vm299, %v306
  $region25: #{cosface_loss.1} parent=0 // pred_fallthru
    _
  // Predicated region
  $region26: #{cosface_loss.1} parent=0 // pred_check
    %p308 = pneg %p15
  $region27: #{cosface_loss.1} parent=0 // pred_check_branch
    %310 = sbr.rel (%p308) target = $region29
  $region28: #{cosface_loss.1} parent=0 // pred_region
    %v311 = vld [vmem:[#allocation3] sm:$0xff]
    %v312 = vld [vmem:[#allocation4] sm:$0xff]
    %v313 = vlog2.pop %v312
    %v314 = vmul.f32 %v313, 0.6931472
    %v315 = vadd.f32 %v311, %v314
    %v316 = vld [vmem:[#allocation5] sm:$0xff]
    %v317 = vsub.f32 %v315, %v316
    %v318 = vcvt.s32.f32 %v230
    %v319 = vmul.f32 %v317, %v318
    %321 = vset.pattern.permute.xlu0 0
    %322 = vperm.xlu0 %321, %v319
    %v323 = vpop.permute.xlu0 %322
    %325 = vst [vmem:[%s3] sm:$0xff] %v323
  $region29: #{cosface_loss.1} parent=0 // pred_fallthru
    _
  // Predicated region
  $region30: #{cosface_loss.1} parent=0 // pred_check
    _
  $region31: #{cosface_loss.1} parent=0 // pred_check_branch
    %327 = sbr.rel (0) target = $region33
  $region32: #{cosface_loss.1} parent=0 // pred_region
    _
  $region33: #{cosface_loss.1} parent=0 // pred_fallthru
    _
  // Predicated region
  $region34: #{cosface_loss.1} parent=0 // pred_check
    _
  $region35: #{cosface_loss.1} parent=0 // pred_check_branch
    %329 = sbr.rel (0) target = $region37
  $region36: #{cosface_loss.1} parent=0 // pred_region
    _
  $region37: #{cosface_loss.1} parent=0 // pred_fallthru
    _

</llo_original>
